<compile_context>
chip_gen: v7x
topology: tpu7x:2x2x1
jax: 0.10.0
libtpu: 0.0.40
codegen_flags: <defaults>
</compile_context>

<pallas_src>
import jax
import jax.numpy as jnp
from jax.experimental import pallas as pl
from jax.experimental.pallas import tpu as pltpu


def _round_up(x, m):
    return ((x + m - 1) // m) * m


def _sublane_multiple(dtype):
    bits = jnp.dtype(dtype).itemsize * 8
    if bits >= 32:
        return 8
    if bits == 16:
        return 16
    return 32


def _vmem_budget_bytes():
    # Physical VMEM per TensorCore; fall back to the tightest current
    # generation (v7x: 64 MiB) if the query is unavailable.
    try:
        cap = int(pltpu.get_tpu_info().vmem_capacity_bytes)
        if cap <= 0:
            raise ValueError("bad vmem capacity")
    except Exception:
        cap = 64 * 1024 * 1024
    return cap


def _mlp_resident_kernel(x_ref, w1_ref, b1_ref, w2_ref, b2_ref, o_ref):
    # x_ref:  (tm, Din)   token tile
    # w1_ref: (Din, H)    fc1 weight (stored as (in, out) = weight.T)
    # b1_ref: (1, H)
    # w2_ref: (H, Dout_p) fc2 weight (stored as (in, out) = weight.T)
    # b2_ref: (1, Dout_p)
    x = x_ref[...]
    h = jnp.dot(x, w1_ref[...], preferred_element_type=jnp.float32) + b1_ref[...]
    h = jnp.maximum(h, 0.0)
    y = jnp.dot(h.astype(w2_ref.dtype), w2_ref[...],
                preferred_element_type=jnp.float32) + b2_ref[...]
    o_ref[...] = y.astype(o_ref.dtype)


def _mlp_chunked_kernel(x_ref, w1_ref, b1_ref, w2_ref, b2_ref, o_ref, acc_ref):
    # Streams the hidden dimension: grid = (M tiles, H chunks).
    hk = pl.program_id(1)

    @pl.when(hk == 0)
    def _():
        acc_ref[...] = jnp.zeros_like(acc_ref)

    h = jnp.dot(x_ref[...], w1_ref[...],
                preferred_element_type=jnp.float32) + b1_ref[...]
    h = jnp.maximum(h, 0.0)  # elementwise -> exact under H-chunking
    acc_ref[...] += jnp.dot(h.astype(w2_ref.dtype), w2_ref[...],
                            preferred_element_type=jnp.float32)

    @pl.when(hk == pl.num_programs(1) - 1)
    def _():
        o_ref[...] = (acc_ref[...] + b2_ref[...]).astype(o_ref.dtype)


def mlp_pallas(x, w1, b1, w2, b2, *, block_m=512):
    """MLP forward: relu(x @ w1 + b1) @ w2 + b2.

    x : (..., Din)        any leading dims (batch, seq, ...)
    w1: (Din, H)  b1: (H,)    (PyTorch fc1.weight.T, fc1.bias)
    w2: (H, Dout) b2: (Dout,) (PyTorch fc2.weight.T, fc2.bias)
    """
    *lead, Din = x.shape
    H = w1.shape[1]
    Dout = w2.shape[1]

    x_dtype = x.dtype
    x_isz = jnp.dtype(x_dtype).itemsize
    w_isz = jnp.dtype(w1.dtype).itemsize
    b_isz = jnp.dtype(b1.dtype).itemsize

    # Flatten tokens; keep feature axis last (lane-dense, no transposes).
    xm = x.reshape(-1, Din)
    M = xm.shape[0]

    # Lane-dense output: pad Dout to a multiple of 128 with zero weight/bias
    # columns (exact; padded columns are sliced away below).
    Dout_p = _round_up(Dout, 128)
    if Dout_p != Dout:
        w2 = jnp.pad(w2, ((0, 0), (0, Dout_p - Dout)))
        b2 = jnp.pad(b2, ((0, Dout_p - Dout),))

    # Dtype-aware token tile, chosen to minimise last-tile padding and to give
    # >= 2 grid steps when possible (megacore on v7x).
    sub = _sublane_multiple(x_dtype)
    if M <= 128:
        tm = _round_up(M, sub)
    else:
        cands = [c for c in (128, 256, 384, 512) if c <= max(block_m, 128)]
        best = None
        for c in cands:
            mp = _round_up(M, c)
            waste = mp - M
            steps = mp // c
            key = (waste, 0 if steps >= 2 else 1, -c)
            if best is None or key < best[0]:
                best = (key, c)
        tm = best[1]
    Mp = _round_up(M, tm)
    if Mp != M:
        xm = jnp.pad(xm, ((0, Mp - M), (0, 0)))

    # VMEM budgeting: explicit scoped limit + resident-vs-streamed dispatch.
    vmem_cap = _vmem_budget_bytes()
    vmem_limit = min(int(0.85 * vmem_cap), 112 * 1024 * 1024)

    resident_weight_bytes = (Din * H + H * Dout_p) * w_isz + (H + Dout_p) * b_isz
    act_bytes = 2 * tm * Din * x_isz + 2 * tm * Dout_p * x_isz  # double-buffered
    hidden_bytes = tm * H * 4                                    # live f32 hidden
    use_resident = (resident_weight_bytes + act_bytes + hidden_bytes
                    ) <= int(0.6 * vmem_limit)

    cost = pl.CostEstimate(
        flops=2 * Mp * Din * H + 2 * Mp * H * Dout_p,
        transcendentals=0,
        bytes_accessed=(Mp * Din + Mp * Dout_p) * x_isz
        + (Din * H + H * Dout_p + H + Dout_p) * w_isz,
    )

    b1_2d = b1.reshape(1, H)
    b2_2d = b2.reshape(1, Dout_p)

    if use_resident:
        grid = (Mp // tm,)
        out = pl.pallas_call(
            _mlp_resident_kernel,
            out_shape=jax.ShapeDtypeStruct((Mp, Dout_p), x_dtype),
            grid=grid,
            in_specs=[
                pl.BlockSpec((tm, Din), lambda i: (i, 0)),        # token tile
                # Constant index maps -> single-buffer resident weights/biases.
                pl.BlockSpec((Din, H), lambda i: (0, 0),
                             pipeline_mode=pl.Buffered(1)),
                pl.BlockSpec((1, H), lambda i: (0, 0),
                             pipeline_mode=pl.Buffered(1)),
                pl.BlockSpec((H, Dout_p), lambda i: (0, 0),
                             pipeline_mode=pl.Buffered(1)),
                pl.BlockSpec((1, Dout_p), lambda i: (0, 0),
                             pipeline_mode=pl.Buffered(1)),
            ],
            out_specs=pl.BlockSpec((tm, Dout_p), lambda i: (i, 0)),
            compiler_params=pltpu.CompilerParams(
                dimension_semantics=("parallel",),
                vmem_limit_bytes=vmem_limit),
            cost_estimate=cost,
        )(xm, w1, b1_2d, w2, b2_2d)
    else:
        # Streamed fallback for large weights (e.g. v7x 64 MiB / TC): chunk H.
        th = min(512, _round_up(H, 128))
        Hp = _round_up(H, th)
        if Hp != H:
            # relu(x @ 0 + 0) = 0 and 0 @ w2_pad = 0 -> zero padding is exact.
            w1 = jnp.pad(w1, ((0, 0), (0, Hp - H)))
            b1_2d = jnp.pad(b1_2d, ((0, 0), (0, Hp - H)))
            w2 = jnp.pad(w2, ((0, Hp - H), (0, 0)))
        grid = (Mp // tm, Hp // th)
        out = pl.pallas_call(
            _mlp_chunked_kernel,
            out_shape=jax.ShapeDtypeStruct((Mp, Dout_p), x_dtype),
            grid=grid,
            in_specs=[
                pl.BlockSpec((tm, Din), lambda i, h: (i, 0)),
                pl.BlockSpec((Din, th), lambda i, h: (0, h)),
                pl.BlockSpec((1, th), lambda i, h: (0, h)),
                pl.BlockSpec((th, Dout_p), lambda i, h: (h, 0)),
                pl.BlockSpec((1, Dout_p), lambda i, h: (0, 0),
                             pipeline_mode=pl.Buffered(1)),
            ],
            out_specs=pl.BlockSpec((tm, Dout_p), lambda i, h: (i, 0)),
            scratch_shapes=[pltpu.VMEM((tm, Dout_p), jnp.float32)],
            compiler_params=pltpu.CompilerParams(
                dimension_semantics=("parallel", "arbitrary"),
                vmem_limit_bytes=vmem_limit),
            cost_estimate=cost,
        )(xm, w1, b1_2d, w2, b2_2d)

    out = out[:M, :Dout]
    return out.reshape(*lead, Dout)


def _reference(x, w1, b1, w2, b2):
    h = jax.nn.relu(jnp.einsum('...i,ij->...j', x, w1) + b1)
    return jnp.einsum('...i,ij->...j', h, w2) + b2


if __name__ == "__main__":
    key = jax.random.PRNGKey(0)
    # Small shapes consistent with the module: batch=2, seq=8,
    # in_features=32, hidden_features=64, out_features=32.
    B, S, Din, Hid, Dout = 2, 8, 32, 64, 32

    k1, k2, k3, k4, k5 = jax.random.split(key, 5)
    x = jax.random.normal(k1, (B, S, Din), dtype=jnp.float32)

    # Deterministic Linear-style init; weights stored as (in, out) = weight.T.
    s1 = 1.0 / (Din ** 0.5)
    s2 = 1.0 / (Hid ** 0.5)
    w1 = jax.random.uniform(k2, (Din, Hid), jnp.float32, -s1, s1)
    b1 = jax.random.uniform(k3, (Hid,), jnp.float32, -s1, s1)
    w2 = jax.random.uniform(k4, (Hid, Dout), jnp.float32, -s2, s2)
    b2 = jax.random.uniform(k5, (Dout,), jnp.float32, -s2, s2)

    out = mlp_pallas(x, w1, b1, w2, b2)
    out = jax.block_until_ready(out)

    ref = _reference(x, w1, b1, w2, b2)
    assert out.shape == (B, S, Dout) and out.dtype == x.dtype
    assert jnp.allclose(out, ref, atol=1e-5, rtol=1e-5), "mismatch vs reference"

    print("KERNEL_OK")
</pallas_src>

<mosaic_0001>
module attributes {stable_mosaic.version = 11 : i64} {
  func.func @_mlp_resident_kernel(%arg0: i32, %arg1: memref<16x32xf32, #tpu.memory_space<vmem>>, %arg2: memref<32x64xf32, #tpu.memory_space<vmem>>, %arg3: memref<1x64xf32, #tpu.memory_space<vmem>>, %arg4: memref<64x128xf32, #tpu.memory_space<vmem>>, %arg5: memref<1x128xf32, #tpu.memory_space<vmem>>, %arg6: memref<16x128xf32, #tpu.memory_space<vmem>>) attributes {dimension_semantics = [#tpu.dimension_semantics<parallel>], iteration_bounds = array<i64: 1>, scalar_prefetch = 0 : i64, scratch_operands = 0 : i64, tpu.core_type = #tpu.core_type<tc>, window_params = [{transform_indices = @transform_0, window_bounds = array<i64: 16, 32>}, {pipeline_mode = #tpu.pipeline_mode<synchronous>, transform_indices = @transform_1, window_bounds = array<i64: 32, 64>}, {pipeline_mode = #tpu.pipeline_mode<synchronous>, transform_indices = @transform_2, window_bounds = array<i64: 1, 64>}, {pipeline_mode = #tpu.pipeline_mode<synchronous>, transform_indices = @transform_3, window_bounds = array<i64: 64, 128>}, {pipeline_mode = #tpu.pipeline_mode<synchronous>, transform_indices = @transform_4, window_bounds = array<i64: 1, 128>}, {transform_indices = @transform_5, window_bounds = array<i64: 16, 128>}]} {
    %c0 = arith.constant 0 : index
    %c0_0 = arith.constant 0 : index
    %0 = vector.load %arg1[%c0, %c0_0] : memref<16x32xf32, #tpu.memory_space<vmem>>, vector<16x32xf32>
    %c0_1 = arith.constant 0 : index
    %c0_2 = arith.constant 0 : index
    %1 = vector.load %arg2[%c0_1, %c0_2] : memref<32x64xf32, #tpu.memory_space<vmem>>, vector<32x64xf32>
    %cst = arith.constant dense<0.000000e+00> : vector<16x64xf32>
    %2 = tpu.matmul %0, %1, %cst {dimension_numbers = #tpu.dot_dimension_numbers<[1], [0], [0], [1], [0, 0, 1, 1], [], []>} : vector<16x32xf32>, vector<32x64xf32>, vector<16x64xf32> -> vector<16x64xf32>
    %c0_3 = arith.constant 0 : index
    %c0_4 = arith.constant 0 : index
    %3 = vector.load %arg3[%c0_3, %c0_4] : memref<1x64xf32, #tpu.memory_space<vmem>>, vector<1x64xf32>
    %4 = vector.broadcast %3 : vector<1x64xf32> to vector<16x64xf32>
    %5 = arith.addf %2, %4 : vector<16x64xf32>
    %cst_5 = arith.constant 0.000000e+00 : f32
    %6 = vector.broadcast %cst_5 : f32 to vector<16x64xf32>
    %7 = arith.maximumf %5, %6 : vector<16x64xf32>
    %c0_6 = arith.constant 0 : index
    %c0_7 = arith.constant 0 : index
    %8 = vector.load %arg4[%c0_6, %c0_7] : memref<64x128xf32, #tpu.memory_space<vmem>>, vector<64x128xf32>
    %cst_8 = arith.constant dense<0.000000e+00> : vector<16x128xf32>
    %9 = tpu.matmul %7, %8, %cst_8 {dimension_numbers = #tpu.dot_dimension_numbers<[1], [0], [0], [1], [0, 0, 1, 1], [], []>} : vector<16x64xf32>, vector<64x128xf32>, vector<16x128xf32> -> vector<16x128xf32>
    %c0_9 = arith.constant 0 : index
    %c0_10 = arith.constant 0 : index
    %10 = vector.load %arg5[%c0_9, %c0_10] : memref<1x128xf32, #tpu.memory_space<vmem>>, vector<1x128xf32>
    %11 = vector.broadcast %10 : vector<1x128xf32> to vector<16x128xf32>
    %12 = arith.addf %9, %11 : vector<16x128xf32>
    %c0_11 = arith.constant 0 : index
    %c0_12 = arith.constant 0 : index
    %13 = vector.load %arg6[%c0_11, %c0_12] : memref<16x128xf32, #tpu.memory_space<vmem>>, vector<16x128xf32>
    tpu.vector_store %arg6[%c0_11, %c0_12], %12 {strides = array<i32>} : memref<16x128xf32, #tpu.memory_space<vmem>>, vector<16x128xf32>,
    return
  }
  func.func @transform_0(%arg0: i32) -> (i32, i32) {
    %c0_i32 = arith.constant 0 : i32
    %c0_i32_0 = arith.constant 0 : i32
    return %arg0, %c0_i32 : i32, i32
  }
  func.func @transform_1(%arg0: i32) -> (i32, i32) {
    %c0_i32 = arith.constant 0 : i32
    %c0_i32_0 = arith.constant 0 : i32
    %c0_i32_1 = arith.constant 0 : i32
    return %c0_i32, %c0_i32_0 : i32, i32
  }
  func.func @transform_2(%arg0: i32) -> (i32, i32) {
    %c0_i32 = arith.constant 0 : i32
    %c0_i32_0 = arith.constant 0 : i32
    %c0_i32_1 = arith.constant 0 : i32
    return %c0_i32, %c0_i32_0 : i32, i32
  }
  func.func @transform_3(%arg0: i32) -> (i32, i32) {
    %c0_i32 = arith.constant 0 : i32
    %c0_i32_0 = arith.constant 0 : i32
    %c0_i32_1 = arith.constant 0 : i32
    return %c0_i32, %c0_i32_0 : i32, i32
  }
  func.func @transform_4(%arg0: i32) -> (i32, i32) {
    %c0_i32 = arith.constant 0 : i32
    %c0_i32_0 = arith.constant 0 : i32
    %c0_i32_1 = arith.constant 0 : i32
    return %c0_i32, %c0_i32_0 : i32, i32
  }
  func.func @transform_5(%arg0: i32) -> (i32, i32) {
    %c0_i32 = arith.constant 0 : i32
    %c0_i32_0 = arith.constant 0 : i32
    return %arg0, %c0_i32 : i32, i32
  }
}

</mosaic_0001>

<llo_original>
// kernel: tpu_custom_call.1
$region0: #{tpu_custom_call.1}
  #allocation0 [shape = 'u32[]', space=smem, size = 0x4, offset = 0x4, fixed_abs, tag = 'smem constant byte address 0x4 - core index']
  #allocation1 [shape = 'u32[144,128]{1,0:T(1,128)}', space=vmem, size = 0x12000, scoped, tag = 'internal scratch']
  %s0 = inlined_call_operand.hbm [shape: f32[16,32], index: 0, kind: input, shape index: {}]
  %s1 = inlined_call_operand.hbm [shape: f32[32,64], index: 1, kind: input, shape index: {}]
  %s2 = inlined_call_operand.vmem [shape: f32[1,64], index: 2, kind: input, shape index: {}]
  %s3 = inlined_call_operand.hbm [shape: f32[64,128], index: 3, kind: input, shape index: {}]
  %s4 = inlined_call_operand.vmem [shape: f32[1,128], index: 4, kind: input, shape index: {}]
  %s5 = inlined_call_operand.hbm [shape: f32[16,128], index: 5, kind: output, shape index: {}]
  %s6 = sld [smem:[#allocation0]]
  $region42: #{tpu_custom_call.1} parent=0
    _
  %s8 = ssub.s32 1, %s6
  %s9 = scalar_select 0, %s8, %s6
  $region1: #{tpu_custom_call.1} parent=0
    #allocation2 [shape = 'u8[8192]{0}', space=vmem, size = 0x2000, scoped, tag = 'input window, operand 0, single buffered']
    #allocation3 [shape = 's32[1]{0}', space=sflag, size = 0x4, scoped, tag = 'scoped memory for tpu_custom_call.1']
    #allocation4 [shape = 's32[1]{0}', space=sflag, size = 0x4, scoped, tag = 'scoped memory for tpu_custom_call.1']
    #allocation5 [shape = 'u8[16384]{0}', space=vmem, size = 0x4000, scoped, tag = 'input window, operand 1, single buffered']
    #allocation6 [shape = 's32[1]{0}', space=sflag, size = 0x4, scoped, tag = 'scoped memory for tpu_custom_call.1']
    #allocation7 [shape = 'u8[32768]{0}', space=vmem, size = 0x8000, scoped, tag = 'input window, operand 3, single buffered']
    #allocation8 [shape = 'u8[8192]{0}', space=vmem, size = 0x2000, scoped, tag = 'output window, operand 0, single buffered']
    %10 = vsyncpa [#allocation3], 0
    %11 = vsyncpa [#allocation6], 0
    %12 = vsyncpa [#allocation4], 0
    // Predicated region
    $region2: #{tpu_custom_call.1} parent=1 // pred_check
      _
    $region3: #{tpu_custom_call.1} parent=1 // pred_check_branch
      %14 = sbr.rel (0) target = $region5
    $region4: #{tpu_custom_call.1} parent=1 // pred_region
      %s16 = ssub.s32 256, 256
      %17 = vsyncadd [#allocation3], %s16
      %s18 = sshll.u32 [#allocation2], 4
      %s19 = int_to_ptr.vmem [resolvable:$true] %s18
      %24 = dma.hbm_to_vmem [thread:$0]  %s0, 256, %s19, [#allocation3], 128, 128, 8
    $region5: #{tpu_custom_call.1} parent=1 // pred_fallthru
      _
    // Predicated region
    $region6: #{tpu_custom_call.1} parent=1 // pred_check
      _
    $region7: #{tpu_custom_call.1} parent=1 // pred_check_branch
      %26 = sbr.rel (0) target = $region9
    $region8: #{tpu_custom_call.1} parent=1 // pred_region
      %s28 = ssub.s32 512, 512
      %29 = vsyncadd [#allocation6], %s28
      %s30 = sshll.u32 [#allocation5], 4
      %s31 = int_to_ptr.vmem [resolvable:$true] %s30
      %36 = dma.hbm_to_vmem [thread:$0]  %s1, 512, %s31, [#allocation6], 128, 128, 8
    $region9: #{tpu_custom_call.1} parent=1 // pred_fallthru
      _
    // Predicated region
    $region10: #{tpu_custom_call.1} parent=1 // pred_check
      _
    $region11: #{tpu_custom_call.1} parent=1 // pred_check_branch
      %38 = sbr.rel (0) target = $region13
    $region12: #{tpu_custom_call.1} parent=1 // pred_region
      _
    $region13: #{tpu_custom_call.1} parent=1 // pred_fallthru
      _
    // Predicated region
    $region14: #{tpu_custom_call.1} parent=1 // pred_check
      _
    $region15: #{tpu_custom_call.1} parent=1 // pred_check_branch
      %40 = sbr.rel (0) target = $region17
    $region16: #{tpu_custom_call.1} parent=1 // pred_region
      %s42 = ssub.s32 1024, 1024
      %43 = vsyncadd [#allocation6], %s42
      %s44 = sshll.u32 [#allocation7], 4
      %s45 = int_to_ptr.vmem [resolvable:$true] %s44
      %50 = dma.hbm_to_vmem [thread:$0]  %s3, 1024, %s45, [#allocation6], 128, 128, 8
    $region17: #{tpu_custom_call.1} parent=1 // pred_fallthru
      _
    // Predicated region
    $region18: #{tpu_custom_call.1} parent=1 // pred_check
      _
    $region19: #{tpu_custom_call.1} parent=1 // pred_check_branch
      %52 = sbr.rel (0) target = $region21
    $region20: #{tpu_custom_call.1} parent=1 // pred_region
      _
    $region21: #{tpu_custom_call.1} parent=1 // pred_fallthru
      _
    // Predicated region
    $region22: #{tpu_custom_call.1} parent=1 // pred_check
      _
    $region23: #{tpu_custom_call.1} parent=1 // pred_check_branch
      %54 = sbr.rel (0) target = $region25
    $region24: #{tpu_custom_call.1} parent=1 // pred_region
      %55 = dma.done [#allocation3], 256
    $region25: #{tpu_custom_call.1} parent=1 // pred_fallthru
      _
    // Predicated region
    $region26: #{tpu_custom_call.1} parent=1 // pred_check
      _
    $region27: #{tpu_custom_call.1} parent=1 // pred_check_branch
      %57 = sbr.rel (0) target = $region29
    $region28: #{tpu_custom_call.1} parent=1 // pred_region
      %58 = dma.done [#allocation6], 512
    $region29: #{tpu_custom_call.1} parent=1 // pred_fallthru
      _
    // Predicated region
    $region30: #{tpu_custom_call.1} parent=1 // pred_check
      _
    $region31: #{tpu_custom_call.1} parent=1 // pred_check_branch
      %60 = sbr.rel (0) target = $region33
    $region32: #{tpu_custom_call.1} parent=1 // pred_region
      %61 = dma.done [#allocation6], 1024
    $region33: #{tpu_custom_call.1} parent=1 // pred_fallthru
      _
    %v62 = vld [vmem:[#allocation2] sm:$0xff]
    %v63 = vld [vmem:[#allocation2 + $0x8] sm:$0xff]
    %v64 = vld [vmem:[#allocation5] sm:$0xff]
    %v65 = vld [vmem:[#allocation5 + $0x8] sm:$0xff]
    %v66 = vld [vmem:[#allocation5 + $0x10] sm:$0xff]
    %v67 = vld [vmem:[#allocation5 + $0x18] sm:$0xff]
    %v68 = vld [vmem:[%s2] sm:$0x1]
    %v70 = vlaneseq
    %v71 = vshrl.u32 %v70, 7
    %v72 = vsub.s32 0, %v71
    %v73 = vrot.slane %v68, %v72
    %vm75 = vcmask 261120
    %v77 = vsel %vm75, %v62, 0
    %v80 = vsel %vm75, %v63, 0
    %82 = vmatprep.subr.mxu0 0.0
    %83 = vmatpush1.msra.mxu0 %v64
    %84 = vmatprep.subr.mxu0 0.0
    %85 = vmatpush1.msra.mxu0 %v65
    %86 = vmatprep.subr.mxu0 0.0
    %87 = vmatpush1.msra.mxu0 %v66
    %88 = vmatprep.subr.mxu0 0.0
    %89 = vmatpush1.msra.mxu0 %v67
    %90 = vmatprep.subr.mxu0 0.0
    %91 = vmatpush1.msra.mxu0 0.0
    %92 = vmatprep.subr.mxu0 0.0
    %93 = vmatpush1.msra.mxu0 0.0
    %94 = vmatprep.subr.mxu0 0.0
    %95 = vmatpush1.msra.mxu0 0.0
    %96 = vmatprep.subr.mxu0 0.0
    %97 = vmatpush1.msra.mxu0 0.0
    %98 = vmatprep.subr.mxu0 0.0
    %99 = vmatpush1.msra.mxu0 0.0
    %100 = vmatprep.subr.mxu0 0.0
    %101 = vmatpush1.msra.mxu0 0.0
    %102 = vmatprep.subr.mxu0 0.0
    %103 = vmatpush1.msra.mxu0 0.0
    %104 = vmatprep.subr.mxu0 0.0
    %105 = vmatpush1.msra.mxu0 0.0
    %106 = vmatprep.subr.mxu0 0.0
    %107 = vmatpush1.msra.mxu0 0.0
    %108 = vmatprep.subr.mxu0 0.0
    %109 = vmatpush1.msra.mxu0 0.0
    %110 = vmatprep.subr.mxu0 0.0
    %111 = vmatpush1.msra.mxu0 0.0
    %112 = vmatprep.subr.mxu0 0.0
    %113 = vmatpush1.msra.mxu0 0.0
    %114 = vmatprep.subr.mxu0 0.0
    %115 = vmatpush1.msra.mxu0 0.0
    %116 = vmatprep.subr.mxu0 0.0
    %117 = vmatpush1.msra.mxu0 0.0
    %118 = vmatprep.subr.mxu0 0.0
    %119 = vmatpush1.msra.mxu0 0.0
    %120 = vmatprep.subr.mxu0 0.0
    %121 = vmatpush1.msra.mxu0 0.0
    %122 = vmatprep.subr.mxu0 0.0
    %123 = vmatpush1.msra.mxu0 0.0
    %124 = vmatprep.subr.mxu0 0.0
    %125 = vmatpush1.msra.mxu0 0.0
    %126 = vmatprep.subr.mxu0 0.0
    %127 = vmatpush1.msra.mxu0 0.0
    %128 = vmatprep.subr.mxu0 0.0
    %129 = vmatpush1.msra.mxu0 0.0
    %130 = vmatprep.subr.mxu0 0.0
    %131 = vmatpush1.msra.mxu0 0.0
    %132 = vmatprep.subr.mxu0 0.0
    %133 = vmatpush1.msra.mxu0 0.0
    %134 = vmatprep.subr.mxu0 0.0
    %135 = vmatpush1.msra.mxu0 0.0
    %136 = vmatprep.subr.mxu0 0.0
    %137 = vmatpush1.msra.mxu0 0.0
    %138 = vmatprep.subr.mxu0 0.0
    %139 = vmatpush1.msra.mxu0 0.0
    %140 = vmatprep.subr.mxu0 0.0
    %141 = vmatpush1.msra.mxu0 0.0
    %142 = vmatprep.subr.mxu0 0.0
    %143 = vmatpush1.msra.mxu0 0.0
    %144 = vmatprep.subr.mxu0 0.0
    %145 = vmatpush1.msra.mxu0 0.0
    %146 = vmatprep.mubr.f32.mxu0 0.0
    %147 = vmatmul.mubr.f32.gmra.mrb[0].mxu0 %v77
    %v148 = vpop.f32.mrb[0].mxu0
    %v149 = vadd.f32 %v73, %v148
    %v150 = vpop.f32.mrb[0].mxu0
    %151 = vmatprep.mubr.f32.mxu0 0.0
    %152 = vmatmul.mubr.f32.gmra.mrb[0].mxu0 %v80
    %v153 = vpop.f32.mrb[0].mxu0
    %v154 = vadd.f32 %v73, %v153
    %v155 = vpop.f32.mrb[0].mxu0
    %156 = vdwg.mxu0
    %v157 = vmax.f32 %v149, 0.0
    %v158 = vmax.f32 %v154, 0.0
    %v159 = vld [vmem:[#allocation7] sm:$0xff]
    %v160 = vld [vmem:[#allocation7 + $0x8] sm:$0xff]
    %v161 = vld [vmem:[#allocation7 + $0x10] sm:$0xff]
    %v162 = vld [vmem:[#allocation7 + $0x18] sm:$0xff]
    %v163 = vld [vmem:[#allocation7 + $0x20] sm:$0xff]
    %v164 = vld [vmem:[#allocation7 + $0x28] sm:$0xff]
    %v165 = vld [vmem:[#allocation7 + $0x30] sm:$0xff]
    %v166 = vld [vmem:[#allocation7 + $0x38] sm:$0xff]
    %v167 = vld [vmem:[%s4] sm:$0x1]
    %v169 = vlaneseq
    %v170 = vshrl.u32 %v169, 7
    %v171 = vsub.s32 0, %v170
    %v172 = vrot.slane %v167, %v171
    %vm174 = vcmask 523264
    %v176 = vsel %vm174, %v157, 0
    %v179 = vsel %vm174, %v158, 0
    %181 = vmatprep.subr.mxu0 0.0
    %182 = vmatpush1.msra.mxu0 %v159
    %183 = vmatprep.subr.mxu0 0.0
    %184 = vmatpush1.msra.mxu0 %v160
    %185 = vmatprep.subr.mxu0 0.0
    %186 = vmatpush1.msra.mxu0 %v161
    %187 = vmatprep.subr.mxu0 0.0
    %188 = vmatpush1.msra.mxu0 %v162
    %189 = vmatprep.subr.mxu0 0.0
    %190 = vmatpush1.msra.mxu0 %v163
    %191 = vmatprep.subr.mxu0 0.0
    %192 = vmatpush1.msra.mxu0 %v164
    %193 = vmatprep.subr.mxu0 0.0
    %194 = vmatpush1.msra.mxu0 %v165
    %195 = vmatprep.subr.mxu0 0.0
    %196 = vmatpush1.msra.mxu0 %v166
    %197 = vmatprep.subr.mxu0 0.0
    %198 = vmatpush1.msra.mxu0 0.0
    %199 = vmatprep.subr.mxu0 0.0
    %200 = vmatpush1.msra.mxu0 0.0
    %201 = vmatprep.subr.mxu0 0.0
    %202 = vmatpush1.msra.mxu0 0.0
    %203 = vmatprep.subr.mxu0 0.0
    %204 = vmatpush1.msra.mxu0 0.0
    %205 = vmatprep.subr.mxu0 0.0
    %206 = vmatpush1.msra.mxu0 0.0
    %207 = vmatprep.subr.mxu0 0.0
    %208 = vmatpush1.msra.mxu0 0.0
    %209 = vmatprep.subr.mxu0 0.0
    %210 = vmatpush1.msra.mxu0 0.0
    %211 = vmatprep.subr.mxu0 0.0
    %212 = vmatpush1.msra.mxu0 0.0
    %213 = vmatprep.subr.mxu0 0.0
    %214 = vmatpush1.msra.mxu0 0.0
    %215 = vmatprep.subr.mxu0 0.0
    %216 = vmatpush1.msra.mxu0 0.0
    %217 = vmatprep.subr.mxu0 0.0
    %218 = vmatpush1.msra.mxu0 0.0
    %219 = vmatprep.subr.mxu0 0.0
    %220 = vmatpush1.msra.mxu0 0.0
    %221 = vmatprep.subr.mxu0 0.0
    %222 = vmatpush1.msra.mxu0 0.0
    %223 = vmatprep.subr.mxu0 0.0
    %224 = vmatpush1.msra.mxu0 0.0
    %225 = vmatprep.subr.mxu0 0.0
    %226 = vmatpush1.msra.mxu0 0.0
    %227 = vmatprep.subr.mxu0 0.0
    %228 = vmatpush1.msra.mxu0 0.0
    %229 = vmatprep.subr.mxu0 0.0
    %230 = vmatpush1.msra.mxu0 0.0
    %231 = vmatprep.subr.mxu0 0.0
    %232 = vmatpush1.msra.mxu0 0.0
    %233 = vmatprep.subr.mxu0 0.0
    %234 = vmatpush1.msra.mxu0 0.0
    %235 = vmatprep.subr.mxu0 0.0
    %236 = vmatpush1.msra.mxu0 0.0
    %237 = vmatprep.subr.mxu0 0.0
    %238 = vmatpush1.msra.mxu0 0.0
    %239 = vmatprep.subr.mxu0 0.0
    %240 = vmatpush1.msra.mxu0 0.0
    %241 = vmatprep.subr.mxu0 0.0
    %242 = vmatpush1.msra.mxu0 0.0
    %243 = vmatprep.subr.mxu0 0.0
    %244 = vmatpush1.msra.mxu0 0.0
    %245 = vmatprep.mubr.f32.mxu0 0.0
    %246 = vmatmul.mubr.f32.gmra.mrb[0].mxu0 %v176
    %v247 = vpop.f32.mrb[0].mxu0
    %v248 = vadd.f32 %v172, %v247
    %v249 = vpop.f32.mrb[0].mxu0
    %250 = vmatprep.mubr.f32.mxu0 0.0
    %251 = vmatmul.mubr.f32.gmra.mrb[0].mxu0 %v179
    %v252 = vpop.f32.mrb[0].mxu0
    %v253 = vadd.f32 %v172, %v252
    %v254 = vpop.f32.mrb[0].mxu0
    %255 = vdwg.mxu0
    %256 = vst [vmem:[#allocation8] sm:$0xff] %v248
    %257 = vst [vmem:[#allocation8 + $0x8] sm:$0xff] %v253
    // Predicated region
    $region34: #{tpu_custom_call.1} parent=1 // pred_check
      _
    $region35: #{tpu_custom_call.1} parent=1 // pred_check_branch
      %259 = sbr.rel (0) target = $region37
    $region36: #{tpu_custom_call.1} parent=1 // pred_region
      %s261 = ssub.s32 256, 256
      %262 = vsyncadd [#allocation4], %s261
      %s263 = sshll.u32 [#allocation8], 4
      %s264 = int_to_ptr.vmem [resolvable:$true] %s263
      %269 = dma.vmem_to_hbm [thread:$0]  %s264, 256, %s5, [#allocation4], 128, 128, 8
    $region37: #{tpu_custom_call.1} parent=1 // pred_fallthru
      _
    // Predicated region
    $region38: #{tpu_custom_call.1} parent=1 // pred_check
      _
    $region39: #{tpu_custom_call.1} parent=1 // pred_check_branch
      %271 = sbr.rel (0) target = $region41
    $region40: #{tpu_custom_call.1} parent=1 // pred_region
      %272 = dma.done [#allocation4], 256
    $region41: #{tpu_custom_call.1} parent=1 // pred_fallthru
      _
    %273 = vsyncpa [#allocation3], 1
    %274 = vsyncpa [#allocation6], 1
    %275 = vsyncpa [#allocation4], 1

</llo_original>
